<compile_context>
chip_gen: v7x
topology: tpu7x:2x2x1
jax: 0.10.0
libtpu: 0.0.40
codegen_flags: <defaults>
</compile_context>

<pallas_src>
import jax
import jax.numpy as jnp
from jax import lax
from jax.experimental import pallas as pl
from jax.experimental.pallas import tpu as pltpu


def lstm_rnn_kernel(x_ref, p_ref, head_ref, out_ref):
    TB, D = x_ref.shape
    H4 = p_ref.shape[-1]
    H = H4 // 4
    B, C = out_ref.shape
    T = TB // B

    # Packed parameters: rows [0:D) = W_ih^T, [D:D+H) = W_hh^T, [D+H] = bias.
    w_x = p_ref[0:D, :]                      # (D, 4H)
    w_h = p_ref[D:D + H, :]                  # (H, 4H)
    b = p_ref[D + H:D + H + 1, :]            # (1, 4H)

    # All input projections + biases in one batched MXU op, off the serial
    # h-dependence chain.
    xz = jnp.dot(x_ref[...], w_x, preferred_element_type=jnp.float32) + b  # (T*B, 4H)

    # Lane mask selecting the tanh gate g (PyTorch packed gate order i, f, g, o).
    lane = lax.broadcasted_iota(jnp.int32, (B, H4), 1)
    is_g = (lane >= 2 * H) & (lane < 3 * H)

    h = jnp.zeros((B, H), jnp.float32)
    c = jnp.zeros((B, H), jnp.float32)

    # Fully unrolled recurrence: one fused (B,H)@(H,4H) dot + 2 EUP ops per step.
    for t in range(T):
        z = xz[t * B:(t + 1) * B, :] + jnp.dot(
            h, w_h, preferred_element_type=jnp.float32)          # (B, 4H)
        sig = 0.5 * jnp.tanh(0.5 * z) + 0.5                      # sigmoid, 1 EUP op
        tnh = jnp.tanh(z)
        act = jnp.where(is_g, tnh, sig)                          # i,f,o sigmoid; g tanh
        i_g = act[:, 0 * H:1 * H]
        f_g = act[:, 1 * H:2 * H]
        g_g = act[:, 2 * H:3 * H]
        o_g = act[:, 3 * H:4 * H]
        c = f_g * c + i_g * g_g
        h = o_g * jnp.tanh(c)

    # Linear head + numerically stable softmax on lstm_out[-1].
    w_out = head_ref[0:H, :]                 # (H, C)
    b_out = head_ref[H:H + 1, :]             # (1, C)
    logits = jnp.dot(h, w_out, preferred_element_type=jnp.float32) + b_out
    m = jnp.max(logits, axis=-1, keepdims=True)
    e = jnp.exp(logits - m)
    out_ref[...] = e / jnp.sum(e, axis=-1, keepdims=True)


def lstm_rnn_forward(x, w_ih, w_hh, b_ih, b_hh, w_out, b_out):
    """x: (T, B, D) float32.  Returns (B, C) float32 softmax probabilities."""
    T, B, D = x.shape
    H4 = w_ih.shape[0]
    H = H4 // 4
    C = w_out.shape[0]

    # Wrapper-side lane-dense packing (all columns = 4H = 128 lanes):
    #   params = [ W_ih^T (D,4H) ; W_hh^T (H,4H) ; (b_ih+b_hh) (1,4H) ]
    #   head   = [ W_out^T (H,C) ; b_out (1,C) ]
    x2 = x.reshape(T * B, D)
    params = jnp.concatenate(
        [jnp.transpose(w_ih), jnp.transpose(w_hh), (b_ih + b_hh).reshape(1, H4)],
        axis=0)                                                  # (D+H+1, 4H)
    head = jnp.concatenate(
        [jnp.transpose(w_out), b_out.reshape(1, C)], axis=0)     # (H+1, C)

    return pl.pallas_call(
        lstm_rnn_kernel,
        out_shape=jax.ShapeDtypeStruct((B, C), jnp.float32),
        grid=(1,),
        in_specs=[
            pl.BlockSpec((T * B, D), lambda i: (0, 0)),          # all timesteps resident
            pl.BlockSpec((D + H + 1, H4), lambda i: (0, 0)),     # packed LSTM params
            pl.BlockSpec((H + 1, C), lambda i: (0, 0)),          # packed head params
        ],
        out_specs=pl.BlockSpec((B, C), lambda i: (0, 0)),
        compiler_params=pltpu.CompilerParams(
            dimension_semantics=("arbitrary",),
        ),
    )(x2, params, head)


def _reference_forward(x, w_ih, w_hh, b_ih, b_hh, w_out, b_out):
    """Pure-JAX reference mirroring PyTorch nn.LSTM + Linear + Softmax."""
    T, B, D = x.shape
    H = w_hh.shape[1]
    h = jnp.zeros((B, H), jnp.float32)
    c = jnp.zeros((B, H), jnp.float32)
    for t in range(T):
        gates = x[t] @ w_ih.T + b_ih + h @ w_hh.T + b_hh
        i = jax.nn.sigmoid(gates[:, 0 * H:1 * H])
        f = jax.nn.sigmoid(gates[:, 1 * H:2 * H])
        g = jnp.tanh(gates[:, 2 * H:3 * H])
        o = jax.nn.sigmoid(gates[:, 3 * H:4 * H])
        c = f * c + i * g
        h = o * jnp.tanh(c)
    logits = h @ w_out.T + b_out
    return jax.nn.softmax(logits, axis=-1)


if __name__ == "__main__":
    # Small shapes consistent with the module:
    #   input_shape = (seq_len, no_classes) = (8, 4)  -> LSTM input_size D = 32
    #   hidden_size H = 32, num_layers = 1, batch_size B = 2, T time steps = 8
    seq_len, no_classes = 8, 4
    D = seq_len * no_classes
    H = 32
    B = 2
    T = 8
    C = no_classes

    key = jax.random.PRNGKey(0)
    ks = jax.random.split(key, 7)
    bound = 1.0 / jnp.sqrt(H)

    x = jax.random.normal(ks[0], (T, B, D), dtype=jnp.float32)
    w_ih = jax.random.uniform(ks[1], (4 * H, D), jnp.float32, -bound, bound)
    w_hh = jax.random.uniform(ks[2], (4 * H, H), jnp.float32, -bound, bound)
    b_ih = jax.random.uniform(ks[3], (4 * H,), jnp.float32, -bound, bound)
    b_hh = jax.random.uniform(ks[4], (4 * H,), jnp.float32, -bound, bound)
    w_out = jax.random.uniform(ks[5], (C, H), jnp.float32, -bound, bound)
    b_out = jax.random.uniform(ks[6], (C,), jnp.float32, -bound, bound)

    out = lstm_rnn_forward(x, w_ih, w_hh, b_ih, b_hh, w_out, b_out)
    out = jax.block_until_ready(out)

    ref = _reference_forward(x, w_ih, w_hh, b_ih, b_hh, w_out, b_out)
    assert out.shape == (B, C)
    assert jnp.allclose(out, ref, atol=2e-5, rtol=2e-5), (out, ref)

    print("KERNEL_OK")
</pallas_src>

<mosaic_0001>
module attributes {stable_mosaic.version = 11 : i64} {
  func.func @lstm_rnn_kernel(%arg0: i32, %arg1: memref<16x32xf32, #tpu.memory_space<vmem>>, %arg2: memref<65x128xf32, #tpu.memory_space<vmem>>, %arg3: memref<33x4xf32, #tpu.memory_space<vmem>>, %arg4: memref<2x4xf32, #tpu.memory_space<vmem>>) attributes {dimension_semantics = [#tpu.dimension_semantics<arbitrary>], iteration_bounds = array<i64: 1>, scalar_prefetch = 0 : i64, scratch_operands = 0 : i64, tpu.core_type = #tpu.core_type<tc>, window_params = [{pipeline_mode = #tpu.pipeline_mode<synchronous>, transform_indices = @transform_0, window_bounds = array<i64: 16, 32>}, {pipeline_mode = #tpu.pipeline_mode<synchronous>, transform_indices = @transform_1, window_bounds = array<i64: 65, 128>}, {pipeline_mode = #tpu.pipeline_mode<synchronous>, transform_indices = @transform_2, window_bounds = array<i64: 33, 4>}, {pipeline_mode = #tpu.pipeline_mode<synchronous>, transform_indices = @transform_3, window_bounds = array<i64: 2, 4>}]} {
    %c0 = arith.constant 0 : index
    %c0_0 = arith.constant 0 : index
    %0 = vector.load %arg2[%c0, %c0_0] : memref<65x128xf32, #tpu.memory_space<vmem>>, vector<32x128xf32>
    %c32 = arith.constant 32 : index
    %c0_1 = arith.constant 0 : index
    %1 = vector.load %arg2[%c32, %c0_1] : memref<65x128xf32, #tpu.memory_space<vmem>>, vector<32x128xf32>
    %c64 = arith.constant 64 : index
    %c0_2 = arith.constant 0 : index
    %2 = vector.load %arg2[%c64, %c0_2] : memref<65x128xf32, #tpu.memory_space<vmem>>, vector<1x128xf32>
    %c0_3 = arith.constant 0 : index
    %c0_4 = arith.constant 0 : index
    %3 = vector.load %arg1[%c0_3, %c0_4] : memref<16x32xf32, #tpu.memory_space<vmem>>, vector<16x32xf32>
    %cst = arith.constant dense<0.000000e+00> : vector<16x128xf32>
    %4 = tpu.matmul %3, %0, %cst {dimension_numbers = #tpu.dot_dimension_numbers<[1], [0], [0], [1], [0, 0, 1, 1], [], []>} : vector<16x32xf32>, vector<32x128xf32>, vector<16x128xf32> -> vector<16x128xf32>
    %5 = vector.broadcast %2 : vector<1x128xf32> to vector<16x128xf32>
    %6 = arith.addf %4, %5 : vector<16x128xf32>
    %7 = tpu.iota {dimensions = array<i32: 1>} : vector<2x128xi32>
    %c64_i32 = arith.constant 64 : i32
    %8 = vector.broadcast %c64_i32 : i32 to vector<2x128xi32>
    %9 = arith.cmpi sge, %7, %8 : vector<2x128xi32>
    %c96_i32 = arith.constant 96 : i32
    %10 = vector.broadcast %c96_i32 : i32 to vector<2x128xi32>
    %11 = arith.cmpi slt, %7, %10 : vector<2x128xi32>
    %12 = arith.andi %9, %11 : vector<2x128xi1>
    %cst_5 = arith.constant 0.000000e+00 : f32
    %13 = vector.broadcast %cst_5 : f32 to vector<2x32xf32>
    %cst_6 = arith.constant 0.000000e+00 : f32
    %14 = vector.broadcast %cst_6 : f32 to vector<2x32xf32>
    %15 = vector.extract_strided_slice %6 {offsets = [0, 0], sizes = [2, 128], strides = [1, 1]} : vector<16x128xf32> to vector<2x128xf32>
    %cst_7 = arith.constant dense<0.000000e+00> : vector<2x128xf32>
    %16 = tpu.matmul %13, %1, %cst_7 {dimension_numbers = #tpu.dot_dimension_numbers<[1], [0], [0], [1], [0, 0, 1, 1], [], []>} : vector<2x32xf32>, vector<32x128xf32>, vector<2x128xf32> -> vector<2x128xf32>
    %17 = arith.addf %15, %16 : vector<2x128xf32>
    %cst_8 = arith.constant 5.000000e-01 : f32
    %18 = vector.broadcast %cst_8 : f32 to vector<2x128xf32>
    %19 = arith.mulf %18, %17 : vector<2x128xf32>
    %20 = math.tanh %19 : vector<2x128xf32>
    %cst_9 = arith.constant 5.000000e-01 : f32
    %21 = vector.broadcast %cst_9 : f32 to vector<2x128xf32>
    %22 = arith.mulf %21, %20 : vector<2x128xf32>
    %cst_10 = arith.constant 5.000000e-01 : f32
    %23 = vector.broadcast %cst_10 : f32 to vector<2x128xf32>
    %24 = arith.addf %22, %23 : vector<2x128xf32>
    %25 = math.tanh %17 : vector<2x128xf32>
    %26 = arith.select %12, %25, %24 : vector<2x128xi1>, vector<2x128xf32>
    %27 = vector.extract_strided_slice %26 {offsets = [0, 0], sizes = [2, 32], strides = [1, 1]} : vector<2x128xf32> to vector<2x32xf32>
    %28 = vector.extract_strided_slice %26 {offsets = [0, 32], sizes = [2, 32], strides = [1, 1]} : vector<2x128xf32> to vector<2x32xf32>
    %29 = vector.extract_strided_slice %26 {offsets = [0, 64], sizes = [2, 32], strides = [1, 1]} : vector<2x128xf32> to vector<2x32xf32>
    %30 = vector.extract_strided_slice %26 {offsets = [0, 96], sizes = [2, 32], strides = [1, 1]} : vector<2x128xf32> to vector<2x32xf32>
    %31 = arith.mulf %28, %14 : vector<2x32xf32>
    %32 = arith.mulf %27, %29 : vector<2x32xf32>
    %33 = arith.addf %31, %32 : vector<2x32xf32>
    %34 = math.tanh %33 : vector<2x32xf32>
    %35 = arith.mulf %30, %34 : vector<2x32xf32>
    %36 = vector.extract_strided_slice %6 {offsets = [2, 0], sizes = [2, 128], strides = [1, 1]} : vector<16x128xf32> to vector<2x128xf32>
    %cst_11 = arith.constant dense<0.000000e+00> : vector<2x128xf32>
    %37 = tpu.matmul %35, %1, %cst_11 {dimension_numbers = #tpu.dot_dimension_numbers<[1], [0], [0], [1], [0, 0, 1, 1], [], []>} : vector<2x32xf32>, vector<32x128xf32>, vector<2x128xf32> -> vector<2x128xf32>
    %38 = arith.addf %36, %37 : vector<2x128xf32>
    %cst_12 = arith.constant 5.000000e-01 : f32
    %39 = vector.broadcast %cst_12 : f32 to vector<2x128xf32>
    %40 = arith.mulf %39, %38 : vector<2x128xf32>
    %41 = math.tanh %40 : vector<2x128xf32>
    %cst_13 = arith.constant 5.000000e-01 : f32
    %42 = vector.broadcast %cst_13 : f32 to vector<2x128xf32>
    %43 = arith.mulf %42, %41 : vector<2x128xf32>
    %cst_14 = arith.constant 5.000000e-01 : f32
    %44 = vector.broadcast %cst_14 : f32 to vector<2x128xf32>
    %45 = arith.addf %43, %44 : vector<2x128xf32>
    %46 = math.tanh %38 : vector<2x128xf32>
    %47 = arith.select %12, %46, %45 : vector<2x128xi1>, vector<2x128xf32>
    %48 = vector.extract_strided_slice %47 {offsets = [0, 0], sizes = [2, 32], strides = [1, 1]} : vector<2x128xf32> to vector<2x32xf32>
    %49 = vector.extract_strided_slice %47 {offsets = [0, 32], sizes = [2, 32], strides = [1, 1]} : vector<2x128xf32> to vector<2x32xf32>
    %50 = vector.extract_strided_slice %47 {offsets = [0, 64], sizes = [2, 32], strides = [1, 1]} : vector<2x128xf32> to vector<2x32xf32>
    %51 = vector.extract_strided_slice %47 {offsets = [0, 96], sizes = [2, 32], strides = [1, 1]} : vector<2x128xf32> to vector<2x32xf32>
    %52 = arith.mulf %49, %33 : vector<2x32xf32>
    %53 = arith.mulf %48, %50 : vector<2x32xf32>
    %54 = arith.addf %52, %53 : vector<2x32xf32>
    %55 = math.tanh %54 : vector<2x32xf32>
    %56 = arith.mulf %51, %55 : vector<2x32xf32>
    %57 = vector.extract_strided_slice %6 {offsets = [4, 0], sizes = [2, 128], strides = [1, 1]} : vector<16x128xf32> to vector<2x128xf32>
    %cst_15 = arith.constant dense<0.000000e+00> : vector<2x128xf32>
    %58 = tpu.matmul %56, %1, %cst_15 {dimension_numbers = #tpu.dot_dimension_numbers<[1], [0], [0], [1], [0, 0, 1, 1], [], []>} : vector<2x32xf32>, vector<32x128xf32>, vector<2x128xf32> -> vector<2x128xf32>
    %59 = arith.addf %57, %58 : vector<2x128xf32>
    %cst_16 = arith.constant 5.000000e-01 : f32
    %60 = vector.broadcast %cst_16 : f32 to vector<2x128xf32>
    %61 = arith.mulf %60, %59 : vector<2x128xf32>
    %62 = math.tanh %61 : vector<2x128xf32>
    %cst_17 = arith.constant 5.000000e-01 : f32
    %63 = vector.broadcast %cst_17 : f32 to vector<2x128xf32>
    %64 = arith.mulf %63, %62 : vector<2x128xf32>
    %cst_18 = arith.constant 5.000000e-01 : f32
    %65 = vector.broadcast %cst_18 : f32 to vector<2x128xf32>
    %66 = arith.addf %64, %65 : vector<2x128xf32>
    %67 = math.tanh %59 : vector<2x128xf32>
    %68 = arith.select %12, %67, %66 : vector<2x128xi1>, vector<2x128xf32>
    %69 = vector.extract_strided_slice %68 {offsets = [0, 0], sizes = [2, 32], strides = [1, 1]} : vector<2x128xf32> to vector<2x32xf32>
    %70 = vector.extract_strided_slice %68 {offsets = [0, 32], sizes = [2, 32], strides = [1, 1]} : vector<2x128xf32> to vector<2x32xf32>
    %71 = vector.extract_strided_slice %68 {offsets = [0, 64], sizes = [2, 32], strides = [1, 1]} : vector<2x128xf32> to vector<2x32xf32>
    %72 = vector.extract_strided_slice %68 {offsets = [0, 96], sizes = [2, 32], strides = [1, 1]} : vector<2x128xf32> to vector<2x32xf32>
    %73 = arith.mulf %70, %54 : vector<2x32xf32>
    %74 = arith.mulf %69, %71 : vector<2x32xf32>
    %75 = arith.addf %73, %74 : vector<2x32xf32>
    %76 = math.tanh %75 : vector<2x32xf32>
    %77 = arith.mulf %72, %76 : vector<2x32xf32>
    %78 = vector.extract_strided_slice %6 {offsets = [6, 0], sizes = [2, 128], strides = [1, 1]} : vector<16x128xf32> to vector<2x128xf32>
    %cst_19 = arith.constant dense<0.000000e+00> : vector<2x128xf32>
    %79 = tpu.matmul %77, %1, %cst_19 {dimension_numbers = #tpu.dot_dimension_numbers<[1], [0], [0], [1], [0, 0, 1, 1], [], []>} : vector<2x32xf32>, vector<32x128xf32>, vector<2x128xf32> -> vector<2x128xf32>
    %80 = arith.addf %78, %79 : vector<2x128xf32>
    %cst_20 = arith.constant 5.000000e-01 : f32
    %81 = vector.broadcast %cst_20 : f32 to vector<2x128xf32>
    %82 = arith.mulf %81, %80 : vector<2x128xf32>
    %83 = math.tanh %82 : vector<2x128xf32>
    %cst_21 = arith.constant 5.000000e-01 : f32
    %84 = vector.broadcast %cst_21 : f32 to vector<2x128xf32>
    %85 = arith.mulf %84, %83 : vector<2x128xf32>
    %cst_22 = arith.constant 5.000000e-01 : f32
    %86 = vector.broadcast %cst_22 : f32 to vector<2x128xf32>
    %87 = arith.addf %85, %86 : vector<2x128xf32>
    %88 = math.tanh %80 : vector<2x128xf32>
    %89 = arith.select %12, %88, %87 : vector<2x128xi1>, vector<2x128xf32>
    %90 = vector.extract_strided_slice %89 {offsets = [0, 0], sizes = [2, 32], strides = [1, 1]} : vector<2x128xf32> to vector<2x32xf32>
    %91 = vector.extract_strided_slice %89 {offsets = [0, 32], sizes = [2, 32], strides = [1, 1]} : vector<2x128xf32> to vector<2x32xf32>
    %92 = vector.extract_strided_slice %89 {offsets = [0, 64], sizes = [2, 32], strides = [1, 1]} : vector<2x128xf32> to vector<2x32xf32>
    %93 = vector.extract_strided_slice %89 {offsets = [0, 96], sizes = [2, 32], strides = [1, 1]} : vector<2x128xf32> to vector<2x32xf32>
    %94 = arith.mulf %91, %75 : vector<2x32xf32>
    %95 = arith.mulf %90, %92 : vector<2x32xf32>
    %96 = arith.addf %94, %95 : vector<2x32xf32>
    %97 = math.tanh %96 : vector<2x32xf32>
    %98 = arith.mulf %93, %97 : vector<2x32xf32>
    %99 = vector.extract_strided_slice %6 {offsets = [8, 0], sizes = [2, 128], strides = [1, 1]} : vector<16x128xf32> to vector<2x128xf32>
    %cst_23 = arith.constant dense<0.000000e+00> : vector<2x128xf32>
    %100 = tpu.matmul %98, %1, %cst_23 {dimension_numbers = #tpu.dot_dimension_numbers<[1], [0], [0], [1], [0, 0, 1, 1], [], []>} : vector<2x32xf32>, vector<32x128xf32>, vector<2x128xf32> -> vector<2x128xf32>
    %101 = arith.addf %99, %100 : vector<2x128xf32>
    %cst_24 = arith.constant 5.000000e-01 : f32
    %102 = vector.broadcast %cst_24 : f32 to vector<2x128xf32>
    %103 = arith.mulf %102, %101 : vector<2x128xf32>
    %104 = math.tanh %103 : vector<2x128xf32>
    %cst_25 = arith.constant 5.000000e-01 : f32
    %105 = vector.broadcast %cst_25 : f32 to vector<2x128xf32>
    %106 = arith.mulf %105, %104 : vector<2x128xf32>
    %cst_26 = arith.constant 5.000000e-01 : f32
    %107 = vector.broadcast %cst_26 : f32 to vector<2x128xf32>
    %108 = arith.addf %106, %107 : vector<2x128xf32>
    %109 = math.tanh %101 : vector<2x128xf32>
    %110 = arith.select %12, %109, %108 : vector<2x128xi1>, vector<2x128xf32>
    %111 = vector.extract_strided_slice %110 {offsets = [0, 0], sizes = [2, 32], strides = [1, 1]} : vector<2x128xf32> to vector<2x32xf32>
    %112 = vector.extract_strided_slice %110 {offsets = [0, 32], sizes = [2, 32], strides = [1, 1]} : vector<2x128xf32> to vector<2x32xf32>
    %113 = vector.extract_strided_slice %110 {offsets = [0, 64], sizes = [2, 32], strides = [1, 1]} : vector<2x128xf32> to vector<2x32xf32>
    %114 = vector.extract_strided_slice %110 {offsets = [0, 96], sizes = [2, 32], strides = [1, 1]} : vector<2x128xf32> to vector<2x32xf32>
    %115 = arith.mulf %112, %96 : vector<2x32xf32>
    %116 = arith.mulf %111, %113 : vector<2x32xf32>
    %117 = arith.addf %115, %116 : vector<2x32xf32>
    %118 = math.tanh %117 : vector<2x32xf32>
    %119 = arith.mulf %114, %118 : vector<2x32xf32>
    %120 = vector.extract_strided_slice %6 {offsets = [10, 0], sizes = [2, 128], strides = [1, 1]} : vector<16x128xf32> to vector<2x128xf32>
    %cst_27 = arith.constant dense<0.000000e+00> : vector<2x128xf32>
    %121 = tpu.matmul %119, %1, %cst_27 {dimension_numbers = #tpu.dot_dimension_numbers<[1], [0], [0], [1], [0, 0, 1, 1], [], []>} : vector<2x32xf32>, vector<32x128xf32>, vector<2x128xf32> -> vector<2x128xf32>
    %122 = arith.addf %120, %121 : vector<2x128xf32>
    %cst_28 = arith.constant 5.000000e-01 : f32
    %123 = vector.broadcast %cst_28 : f32 to vector<2x128xf32>
    %124 = arith.mulf %123, %122 : vector<2x128xf32>
    %125 = math.tanh %124 : vector<2x128xf32>
    %cst_29 = arith.constant 5.000000e-01 : f32
    %126 = vector.broadcast %cst_29 : f32 to vector<2x128xf32>
    %127 = arith.mulf %126, %125 : vector<2x128xf32>
    %cst_30 = arith.constant 5.000000e-01 : f32
    %128 = vector.broadcast %cst_30 : f32 to vector<2x128xf32>
    %129 = arith.addf %127, %128 : vector<2x128xf32>
    %130 = math.tanh %122 : vector<2x128xf32>
    %131 = arith.select %12, %130, %129 : vector<2x128xi1>, vector<2x128xf32>
    %132 = vector.extract_strided_slice %131 {offsets = [0, 0], sizes = [2, 32], strides = [1, 1]} : vector<2x128xf32> to vector<2x32xf32>
    %133 = vector.extract_strided_slice %131 {offsets = [0, 32], sizes = [2, 32], strides = [1, 1]} : vector<2x128xf32> to vector<2x32xf32>
    %134 = vector.extract_strided_slice %131 {offsets = [0, 64], sizes = [2, 32], strides = [1, 1]} : vector<2x128xf32> to vector<2x32xf32>
    %135 = vector.extract_strided_slice %131 {offsets = [0, 96], sizes = [2, 32], strides = [1, 1]} : vector<2x128xf32> to vector<2x32xf32>
    %136 = arith.mulf %133, %117 : vector<2x32xf32>
    %137 = arith.mulf %132, %134 : vector<2x32xf32>
    %138 = arith.addf %136, %137 : vector<2x32xf32>
    %139 = math.tanh %138 : vector<2x32xf32>
    %140 = arith.mulf %135, %139 : vector<2x32xf32>
    %141 = vector.extract_strided_slice %6 {offsets = [12, 0], sizes = [2, 128], strides = [1, 1]} : vector<16x128xf32> to vector<2x128xf32>
    %cst_31 = arith.constant dense<0.000000e+00> : vector<2x128xf32>
    %142 = tpu.matmul %140, %1, %cst_31 {dimension_numbers = #tpu.dot_dimension_numbers<[1], [0], [0], [1], [0, 0, 1, 1], [], []>} : vector<2x32xf32>, vector<32x128xf32>, vector<2x128xf32> -> vector<2x128xf32>
    %143 = arith.addf %141, %142 : vector<2x128xf32>
    %cst_32 = arith.constant 5.000000e-01 : f32
    %144 = vector.broadcast %cst_32 : f32 to vector<2x128xf32>
    %145 = arith.mulf %144, %143 : vector<2x128xf32>
    %146 = math.tanh %145 : vector<2x128xf32>
    %cst_33 = arith.constant 5.000000e-01 : f32
    %147 = vector.broadcast %cst_33 : f32 to vector<2x128xf32>
    %148 = arith.mulf %147, %146 : vector<2x128xf32>
    %cst_34 = arith.constant 5.000000e-01 : f32
    %149 = vector.broadcast %cst_34 : f32 to vector<2x128xf32>
    %150 = arith.addf %148, %149 : vector<2x128xf32>
    %151 = math.tanh %143 : vector<2x128xf32>
    %152 = arith.select %12, %151, %150 : vector<2x128xi1>, vector<2x128xf32>
    %153 = vector.extract_strided_slice %152 {offsets = [0, 0], sizes = [2, 32], strides = [1, 1]} : vector<2x128xf32> to vector<2x32xf32>
    %154 = vector.extract_strided_slice %152 {offsets = [0, 32], sizes = [2, 32], strides = [1, 1]} : vector<2x128xf32> to vector<2x32xf32>
    %155 = vector.extract_strided_slice %152 {offsets = [0, 64], sizes = [2, 32], strides = [1, 1]} : vector<2x128xf32> to vector<2x32xf32>
    %156 = vector.extract_strided_slice %152 {offsets = [0, 96], sizes = [2, 32], strides = [1, 1]} : vector<2x128xf32> to vector<2x32xf32>
    %157 = arith.mulf %154, %138 : vector<2x32xf32>
    %158 = arith.mulf %153, %155 : vector<2x32xf32>
    %159 = arith.addf %157, %158 : vector<2x32xf32>
    %160 = math.tanh %159 : vector<2x32xf32>
    %161 = arith.mulf %156, %160 : vector<2x32xf32>
    %162 = vector.extract_strided_slice %6 {offsets = [14, 0], sizes = [2, 128], strides = [1, 1]} : vector<16x128xf32> to vector<2x128xf32>
    %cst_35 = arith.constant dense<0.000000e+00> : vector<2x128xf32>
    %163 = tpu.matmul %161, %1, %cst_35 {dimension_numbers = #tpu.dot_dimension_numbers<[1], [0], [0], [1], [0, 0, 1, 1], [], []>} : vector<2x32xf32>, vector<32x128xf32>, vector<2x128xf32> -> vector<2x128xf32>
    %164 = arith.addf %162, %163 : vector<2x128xf32>
    %cst_36 = arith.constant 5.000000e-01 : f32
    %165 = vector.broadcast %cst_36 : f32 to vector<2x128xf32>
    %166 = arith.mulf %165, %164 : vector<2x128xf32>
    %167 = math.tanh %166 : vector<2x128xf32>
    %cst_37 = arith.constant 5.000000e-01 : f32
    %168 = vector.broadcast %cst_37 : f32 to vector<2x128xf32>
    %169 = arith.mulf %168, %167 : vector<2x128xf32>
    %cst_38 = arith.constant 5.000000e-01 : f32
    %170 = vector.broadcast %cst_38 : f32 to vector<2x128xf32>
    %171 = arith.addf %169, %170 : vector<2x128xf32>
    %172 = math.tanh %164 : vector<2x128xf32>
    %173 = arith.select %12, %172, %171 : vector<2x128xi1>, vector<2x128xf32>
    %174 = vector.extract_strided_slice %173 {offsets = [0, 0], sizes = [2, 32], strides = [1, 1]} : vector<2x128xf32> to vector<2x32xf32>
    %175 = vector.extract_strided_slice %173 {offsets = [0, 32], sizes = [2, 32], strides = [1, 1]} : vector<2x128xf32> to vector<2x32xf32>
    %176 = vector.extract_strided_slice %173 {offsets = [0, 64], sizes = [2, 32], strides = [1, 1]} : vector<2x128xf32> to vector<2x32xf32>
    %177 = vector.extract_strided_slice %173 {offsets = [0, 96], sizes = [2, 32], strides = [1, 1]} : vector<2x128xf32> to vector<2x32xf32>
    %178 = arith.mulf %175, %159 : vector<2x32xf32>
    %179 = arith.mulf %174, %176 : vector<2x32xf32>
    %180 = arith.addf %178, %179 : vector<2x32xf32>
    %181 = math.tanh %180 : vector<2x32xf32>
    %182 = arith.mulf %177, %181 : vector<2x32xf32>
    %c0_39 = arith.constant 0 : index
    %c0_40 = arith.constant 0 : index
    %183 = vector.load %arg3[%c0_39, %c0_40] : memref<33x4xf32, #tpu.memory_space<vmem>>, vector<32x4xf32>
    %c32_41 = arith.constant 32 : index
    %c0_42 = arith.constant 0 : index
    %184 = vector.load %arg3[%c32_41, %c0_42] : memref<33x4xf32, #tpu.memory_space<vmem>>, vector<1x4xf32>
    %cst_43 = arith.constant dense<0.000000e+00> : vector<2x4xf32>
    %185 = tpu.matmul %182, %183, %cst_43 {dimension_numbers = #tpu.dot_dimension_numbers<[1], [0], [0], [1], [0, 0, 1, 1], [], []>} : vector<2x32xf32>, vector<32x4xf32>, vector<2x4xf32> -> vector<2x4xf32>
    %186 = vector.broadcast %184 : vector<1x4xf32> to vector<2x4xf32>
    %187 = arith.addf %185, %186 : vector<2x4xf32>
    %cst_44 = arith.constant dense<0xFF800000> : vector<2xf32>
    %188 = vector.multi_reduction <maximumf>, %187, %cst_44 [1] : vector<2x4xf32> to vector<2xf32>
    %189 = vector.shape_cast %188 : vector<2xf32> to vector<2x1xf32>
    %190 = vector.broadcast %189 : vector<2x1xf32> to vector<2x4xf32>
    %191 = arith.subf %187, %190 : vector<2x4xf32>
    %192 = math.exp %191 : vector<2x4xf32>
    %cst_45 = arith.constant dense<0.000000e+00> : vector<2xf32>
    %193 = vector.multi_reduction <add>, %192, %cst_45 [1] : vector<2x4xf32> to vector<2xf32>
    %194 = vector.shape_cast %193 : vector<2xf32> to vector<2x1xf32>
    %195 = vector.broadcast %194 : vector<2x1xf32> to vector<2x4xf32>
    %196 = arith.divf %192, %195 : vector<2x4xf32>
    %c0_46 = arith.constant 0 : index
    %c0_47 = arith.constant 0 : index
    %197 = vector.load %arg4[%c0_46, %c0_47] : memref<2x4xf32, #tpu.memory_space<vmem>>, vector<2x4xf32>
    tpu.vector_store %arg4[%c0_46, %c0_47], %196 {strides = array<i32>} : memref<2x4xf32, #tpu.memory_space<vmem>>, vector<2x4xf32>,
    return
  }
  func.func @transform_0(%arg0: i32) -> (i32, i32) {
    %c0_i32 = arith.constant 0 : i32
    %c0_i32_0 = arith.constant 0 : i32
    %c0_i32_1 = arith.constant 0 : i32
    return %c0_i32, %c0_i32_0 : i32, i32
  }
  func.func @transform_1(%arg0: i32) -> (i32, i32) {
    %c0_i32 = arith.constant 0 : i32
    %c0_i32_0 = arith.constant 0 : i32
    %c0_i32_1 = arith.constant 0 : i32
    return %c0_i32, %c0_i32_0 : i32, i32
  }
  func.func @transform_2(%arg0: i32) -> (i32, i32) {
    %c0_i32 = arith.constant 0 : i32
    %c0_i32_0 = arith.constant 0 : i32
    %c0_i32_1 = arith.constant 0 : i32
    return %c0_i32, %c0_i32_0 : i32, i32
  }
  func.func @transform_3(%arg0: i32) -> (i32, i32) {
    %c0_i32 = arith.constant 0 : i32
    %c0_i32_0 = arith.constant 0 : i32
    %c0_i32_1 = arith.constant 0 : i32
    return %c0_i32, %c0_i32_0 : i32, i32
  }
}

</mosaic_0001>

<llo_original>
// kernel: tpu_custom_call.1
$region0: #{tpu_custom_call.1}
  #allocation0 [shape = 'u32[]', space=smem, size = 0x4, offset = 0x4, fixed_abs, tag = 'smem constant byte address 0x4 - core index']
  #allocation1 [shape = 'u32[144,128]{1,0:T(1,128)}', space=vmem, size = 0x12000, scoped, tag = 'internal scratch']
  %s0 = inlined_call_operand.vmem [shape: f32[16,32], index: 0, kind: input, shape index: {}]
  %s1 = inlined_call_operand.hbm [shape: f32[65,128], index: 1, kind: input, shape index: {}]
  %s2 = inlined_call_operand.vmem [shape: f32[33,4], index: 2, kind: input, shape index: {}]
  %s3 = inlined_call_operand.hbm [shape: f32[2,4], index: 3, kind: output, shape index: {}]
  %s4 = sld [smem:[#allocation0]]
  $region26: #{tpu_custom_call.1} parent=0
    _
  %s6 = ssub.s32 1, %s4
  %s7 = scalar_select 0, %s6, %s4
  $region1: #{tpu_custom_call.1} parent=0
    #allocation2 [shape = 'u8[36864]{0}', space=vmem, size = 0x9000, scoped, tag = 'input window, operand 1, single buffered']
    #allocation3 [shape = 's32[1]{0}', space=sflag, size = 0x4, scoped, tag = 'scoped memory for tpu_custom_call.1']
    #allocation4 [shape = 's32[1]{0}', space=sflag, size = 0x4, scoped, tag = 'scoped memory for tpu_custom_call.1']
    #allocation5 [shape = 'u8[1024]{0}', space=vmem, size = 0x400, scoped, tag = 'output window, operand 0, single buffered']
    %8 = vsyncpa [#allocation3], 0
    %9 = vsyncpa [#allocation4], 0
    // Predicated region
    $region2: #{tpu_custom_call.1} parent=1 // pred_check
      _
    $region3: #{tpu_custom_call.1} parent=1 // pred_check_branch
      %11 = sbr.rel (0) target = $region5
    $region4: #{tpu_custom_call.1} parent=1 // pred_region
      _
    $region5: #{tpu_custom_call.1} parent=1 // pred_fallthru
      _
    // Predicated region
    $region6: #{tpu_custom_call.1} parent=1 // pred_check
      _
    $region7: #{tpu_custom_call.1} parent=1 // pred_check_branch
      %13 = sbr.rel (0) target = $region9
    $region8: #{tpu_custom_call.1} parent=1 // pred_region
      %s15 = ssub.s32 1152, 1152
      %16 = vsyncadd [#allocation3], %s15
      %s17 = sshll.u32 [#allocation2], 4
      %s18 = int_to_ptr.vmem [resolvable:$true] %s17
      %23 = dma.hbm_to_vmem [thread:$0]  %s1, 1152, %s18, [#allocation3], 128, 128, 8
    $region9: #{tpu_custom_call.1} parent=1 // pred_fallthru
      _
    // Predicated region
    $region10: #{tpu_custom_call.1} parent=1 // pred_check
      _
    $region11: #{tpu_custom_call.1} parent=1 // pred_check_branch
      %25 = sbr.rel (0) target = $region13
    $region12: #{tpu_custom_call.1} parent=1 // pred_region
      _
    $region13: #{tpu_custom_call.1} parent=1 // pred_fallthru
      _
    // Predicated region
    $region14: #{tpu_custom_call.1} parent=1 // pred_check
      _
    $region15: #{tpu_custom_call.1} parent=1 // pred_check_branch
      %27 = sbr.rel (0) target = $region17
    $region16: #{tpu_custom_call.1} parent=1 // pred_region
      %28 = dma.done [#allocation3], 1152
    $region17: #{tpu_custom_call.1} parent=1 // pred_fallthru
      _
    %v29 = vld [vmem:[#allocation2] sm:$0xff]
    %v30 = vld [vmem:[#allocation2 + $0x8] sm:$0xff]
    %v31 = vld [vmem:[#allocation2 + $0x10] sm:$0xff]
    %v32 = vld [vmem:[#allocation2 + $0x18] sm:$0xff]
    %v33 = vld [vmem:[#allocation2 + $0x20] sm:$0xff]
    %v34 = vld [vmem:[#allocation2 + $0x28] sm:$0xff]
    %v35 = vld [vmem:[#allocation2 + $0x30] sm:$0xff]
    %v36 = vld [vmem:[#allocation2 + $0x38] sm:$0xff]
    %v37 = vld [vmem:[#allocation2 + $0x40] sm:$0x1]
    %v38 = vld [vmem:[%s0] sm:$0xff]
    %v39 = vld [vmem:[%s0 + $0x8] sm:$0xff]
    %v40 = vlaneseq
    %v41 = vshrl.u32 %v40, 7
    %v42 = vsub.s32 0, %v41
    %v43 = vrot.slane %v37, %v42
    %vm44 = vcmask 261120
    %v46 = vsel %vm44, %v38, 0
    %v49 = vsel %vm44, %v39, 0
    %51 = vmatprep.subr.mxu0 0.0
    %52 = vmatpush1.msra.mxu0 %v29
    %53 = vmatprep.subr.mxu0 0.0
    %54 = vmatpush1.msra.mxu0 %v30
    %55 = vmatprep.subr.mxu0 0.0
    %56 = vmatpush1.msra.mxu0 %v31
    %57 = vmatprep.subr.mxu0 0.0
    %58 = vmatpush1.msra.mxu0 %v32
    %59 = vmatprep.subr.mxu0 0.0
    %60 = vmatpush1.msra.mxu0 0.0
    %61 = vmatprep.subr.mxu0 0.0
    %62 = vmatpush1.msra.mxu0 0.0
    %63 = vmatprep.subr.mxu0 0.0
    %64 = vmatpush1.msra.mxu0 0.0
    %65 = vmatprep.subr.mxu0 0.0
    %66 = vmatpush1.msra.mxu0 0.0
    %67 = vmatprep.subr.mxu0 0.0
    %68 = vmatpush1.msra.mxu0 0.0
    %69 = vmatprep.subr.mxu0 0.0
    %70 = vmatpush1.msra.mxu0 0.0
    %71 = vmatprep.subr.mxu0 0.0
    %72 = vmatpush1.msra.mxu0 0.0
    %73 = vmatprep.subr.mxu0 0.0
    %74 = vmatpush1.msra.mxu0 0.0
    %75 = vmatprep.subr.mxu0 0.0
    %76 = vmatpush1.msra.mxu0 0.0
    %77 = vmatprep.subr.mxu0 0.0
    %78 = vmatpush1.msra.mxu0 0.0
    %79 = vmatprep.subr.mxu0 0.0
    %80 = vmatpush1.msra.mxu0 0.0
    %81 = vmatprep.subr.mxu0 0.0
    %82 = vmatpush1.msra.mxu0 0.0
    %83 = vmatprep.subr.mxu0 0.0
    %84 = vmatpush1.msra.mxu0 0.0
    %85 = vmatprep.subr.mxu0 0.0
    %86 = vmatpush1.msra.mxu0 0.0
    %87 = vmatprep.subr.mxu0 0.0
    %88 = vmatpush1.msra.mxu0 0.0
    %89 = vmatprep.subr.mxu0 0.0
    %90 = vmatpush1.msra.mxu0 0.0
    %91 = vmatprep.subr.mxu0 0.0
    %92 = vmatpush1.msra.mxu0 0.0
    %93 = vmatprep.subr.mxu0 0.0
    %94 = vmatpush1.msra.mxu0 0.0
    %95 = vmatprep.subr.mxu0 0.0
    %96 = vmatpush1.msra.mxu0 0.0
    %97 = vmatprep.subr.mxu0 0.0
    %98 = vmatpush1.msra.mxu0 0.0
    %99 = vmatprep.subr.mxu0 0.0
    %100 = vmatpush1.msra.mxu0 0.0
    %101 = vmatprep.subr.mxu0 0.0
    %102 = vmatpush1.msra.mxu0 0.0
    %103 = vmatprep.subr.mxu0 0.0
    %104 = vmatpush1.msra.mxu0 0.0
    %105 = vmatprep.subr.mxu0 0.0
    %106 = vmatpush1.msra.mxu0 0.0
    %107 = vmatprep.subr.mxu0 0.0
    %108 = vmatpush1.msra.mxu0 0.0
    %109 = vmatprep.subr.mxu0 0.0
    %110 = vmatpush1.msra.mxu0 0.0
    %111 = vmatprep.subr.mxu0 0.0
    %112 = vmatpush1.msra.mxu0 0.0
    %113 = vmatprep.subr.mxu0 0.0
    %114 = vmatpush1.msra.mxu0 0.0
    %115 = vmatprep.mubr.f32.mxu0 0.0
    %116 = vmatmul.mubr.f32.gmra.mrb[0].mxu0 %v46
    %v117 = vpop.f32.mrb[0].mxu0
    %v118 = vadd.f32 %v43, %v117
    %v119 = vpop.f32.mrb[0].mxu0
    %120 = vmatprep.mubr.f32.mxu0 0.0
    %121 = vmatmul.mubr.f32.gmra.mrb[0].mxu0 %v49
    %v122 = vpop.f32.mrb[0].mxu0
    %v123 = vadd.f32 %v43, %v122
    %v124 = vpop.f32.mrb[0].mxu0
    %125 = vdwg.mxu0
    %v126 = vlaneseq
    %v127 = vand.u32 %v126, 127
    %vm128 = vcmp.ge.s32.totalorder %v127, 64
    %vm129 = vcmp.lt.s32.totalorder %v127, 96
    %vm130 = vmand %vm128, %vm129
    %v132 = vsel %vm44, 0.0, 0
    %134 = vmatprep.subr.mxu0 0.0
    %135 = vmatpush1.msra.mxu0 %v33
    %136 = vmatprep.subr.mxu0 0.0
    %137 = vmatpush1.msra.mxu0 %v34
    %138 = vmatprep.subr.mxu0 0.0
    %139 = vmatpush1.msra.mxu0 %v35
    %140 = vmatprep.subr.mxu0 0.0
    %141 = vmatpush1.msra.mxu0 %v36
    %142 = vmatprep.subr.mxu0 0.0
    %143 = vmatpush1.msra.mxu0 0.0
    %144 = vmatprep.subr.mxu0 0.0
    %145 = vmatpush1.msra.mxu0 0.0
    %146 = vmatprep.subr.mxu0 0.0
    %147 = vmatpush1.msra.mxu0 0.0
    %148 = vmatprep.subr.mxu0 0.0
    %149 = vmatpush1.msra.mxu0 0.0
    %150 = vmatprep.subr.mxu0 0.0
    %151 = vmatpush1.msra.mxu0 0.0
    %152 = vmatprep.subr.mxu0 0.0
    %153 = vmatpush1.msra.mxu0 0.0
    %154 = vmatprep.subr.mxu0 0.0
    %155 = vmatpush1.msra.mxu0 0.0
    %156 = vmatprep.subr.mxu0 0.0
    %157 = vmatpush1.msra.mxu0 0.0
    %158 = vmatprep.subr.mxu0 0.0
    %159 = vmatpush1.msra.mxu0 0.0
    %160 = vmatprep.subr.mxu0 0.0
    %161 = vmatpush1.msra.mxu0 0.0
    %162 = vmatprep.subr.mxu0 0.0
    %163 = vmatpush1.msra.mxu0 0.0
    %164 = vmatprep.subr.mxu0 0.0
    %165 = vmatpush1.msra.mxu0 0.0
    %166 = vmatprep.subr.mxu0 0.0
    %167 = vmatpush1.msra.mxu0 0.0
    %168 = vmatprep.subr.mxu0 0.0
    %169 = vmatpush1.msra.mxu0 0.0
    %170 = vmatprep.subr.mxu0 0.0
    %171 = vmatpush1.msra.mxu0 0.0
    %172 = vmatprep.subr.mxu0 0.0
    %173 = vmatpush1.msra.mxu0 0.0
    %174 = vmatprep.subr.mxu0 0.0
    %175 = vmatpush1.msra.mxu0 0.0
    %176 = vmatprep.subr.mxu0 0.0
    %177 = vmatpush1.msra.mxu0 0.0
    %178 = vmatprep.subr.mxu0 0.0
    %179 = vmatpush1.msra.mxu0 0.0
    %180 = vmatprep.subr.mxu0 0.0
    %181 = vmatpush1.msra.mxu0 0.0
    %182 = vmatprep.subr.mxu0 0.0
    %183 = vmatpush1.msra.mxu0 0.0
    %184 = vmatprep.subr.mxu0 0.0
    %185 = vmatpush1.msra.mxu0 0.0
    %186 = vmatprep.subr.mxu0 0.0
    %187 = vmatpush1.msra.mxu0 0.0
    %188 = vmatprep.subr.mxu0 0.0
    %189 = vmatpush1.msra.mxu0 0.0
    %190 = vmatprep.subr.mxu0 0.0
    %191 = vmatpush1.msra.mxu0 0.0
    %192 = vmatprep.subr.mxu0 0.0
    %193 = vmatpush1.msra.mxu0 0.0
    %194 = vmatprep.subr.mxu0 0.0
    %195 = vmatpush1.msra.mxu0 0.0
    %196 = vmatprep.subr.mxu0 0.0
    %197 = vmatpush1.msra.mxu0 0.0
    %198 = vmatprep.mubr.f32.mxu0 0.0
    %199 = vmatmul.mubr.f32.gmra.mrb[0].mxu0 %v132
    %v200 = vpop.f32.mrb[0].mxu0
    %v201 = vadd.f32 0.0, %v200
    %v202 = vpop.f32.mrb[0].mxu0
    %203 = vdwg.mxu0
    %v204 = vadd.f32 %v118, %v201
    %v205 = vmul.f32 %v204, 0.5
    %v206 = vtanh.pop %v205
    %v207 = vmul.f32 %v206, 0.5
    %v208 = vadd.f32 %v207, 0.5
    %v209 = vtanh.pop %v204
    %v210 = vsel %vm130, %v209, %v208
    %v211 = vmul.f32 %v210, 0.0
    %213 = vrot.lane.b32.xlu0 %v210, 64
    %v214 = vpop.permute.xlu0 %213
    %v216 = vmul.f32 %v210, %v214
    %218 = vrot.lane.b32.xlu0 %v216, 32
    %v219 = vpop.permute.xlu0 %218
    %v221 = vadd.f32 %v211, %v219
    %v222 = vtanh.pop %v221
    %224 = vrot.lane.b32.xlu0 %v222, 64
    %v225 = vpop.permute.xlu0 %224
    %v227 = vmul.f32 %v210, %v225
    %229 = vrot.lane.b32.xlu0 %v227, 32
    %v230 = vpop.permute.xlu0 %229
    %v231 = vsel %vm44, %v230, 0
    %233 = vmatprep.subr.mxu0 0.0
    %234 = vmatpush1.msra.mxu0 %v33
    %235 = vmatprep.subr.mxu0 0.0
    %236 = vmatpush1.msra.mxu0 %v34
    %237 = vmatprep.subr.mxu0 0.0
    %238 = vmatpush1.msra.mxu0 %v35
    %239 = vmatprep.subr.mxu0 0.0
    %240 = vmatpush1.msra.mxu0 %v36
    %241 = vmatprep.subr.mxu0 0.0
    %242 = vmatpush1.msra.mxu0 0.0
    %243 = vmatprep.subr.mxu0 0.0
    %244 = vmatpush1.msra.mxu0 0.0
    %245 = vmatprep.subr.mxu0 0.0
    %246 = vmatpush1.msra.mxu0 0.0
    %247 = vmatprep.subr.mxu0 0.0
    %248 = vmatpush1.msra.mxu0 0.0
    %249 = vmatprep.subr.mxu0 0.0
    %250 = vmatpush1.msra.mxu0 0.0
    %251 = vmatprep.subr.mxu0 0.0
    %252 = vmatpush1.msra.mxu0 0.0
    %253 = vmatprep.subr.mxu0 0.0
    %254 = vmatpush1.msra.mxu0 0.0
    %255 = vmatprep.subr.mxu0 0.0
    %256 = vmatpush1.msra.mxu0 0.0
    %257 = vmatprep.subr.mxu0 0.0
    %258 = vmatpush1.msra.mxu0 0.0
    %259 = vmatprep.subr.mxu0 0.0
    %260 = vmatpush1.msra.mxu0 0.0
    %261 = vmatprep.subr.mxu0 0.0
    %262 = vmatpush1.msra.mxu0 0.0
    %263 = vmatprep.subr.mxu0 0.0
    %264 = vmatpush1.msra.mxu0 0.0
    %265 = vmatprep.subr.mxu0 0.0
    %266 = vmatpush1.msra.mxu0 0.0
    %267 = vmatprep.subr.mxu0 0.0
    %268 = vmatpush1.msra.mxu0 0.0
    %269 = vmatprep.subr.mxu0 0.0
    %270 = vmatpush1.msra.mxu0 0.0
    %271 = vmatprep.subr.mxu0 0.0
    %272 = vmatpush1.msra.mxu0 0.0
    %273 = vmatprep.subr.mxu0 0.0
    %274 = vmatpush1.msra.mxu0 0.0
    %275 = vmatprep.subr.mxu0 0.0
    %276 = vmatpush1.msra.mxu0 0.0
    %277 = vmatprep.subr.mxu0 0.0
    %278 = vmatpush1.msra.mxu0 0.0
    %279 = vmatprep.subr.mxu0 0.0
    %280 = vmatpush1.msra.mxu0 0.0
    %281 = vmatprep.subr.mxu0 0.0
    %282 = vmatpush1.msra.mxu0 0.0
    %283 = vmatprep.subr.mxu0 0.0
    %284 = vmatpush1.msra.mxu0 0.0
    %285 = vmatprep.subr.mxu0 0.0
    %286 = vmatpush1.msra.mxu0 0.0
    %287 = vmatprep.subr.mxu0 0.0
    %288 = vmatpush1.msra.mxu0 0.0
    %289 = vmatprep.subr.mxu0 0.0
    %290 = vmatpush1.msra.mxu0 0.0
    %291 = vmatprep.subr.mxu0 0.0
    %292 = vmatpush1.msra.mxu0 0.0
    %293 = vmatprep.subr.mxu0 0.0
    %294 = vmatpush1.msra.mxu0 0.0
    %295 = vmatprep.subr.mxu0 0.0
    %296 = vmatpush1.msra.mxu0 0.0
    %297 = vmatprep.mubr.f32.mxu0 0.0
    %298 = vmatmul.mubr.f32.gmra.mrb[0].mxu0 %v231
    %v299 = vpop.f32.mrb[0].mxu0
    %v300 = vadd.f32 0.0, %v299
    %v301 = vpop.f32.mrb[0].mxu0
    %302 = vdwg.mxu0
    %v304 = vrot.slane %v300, 6
    %v306 = vadd.f32 %v118, %v304
    %v307 = vmul.f32 %v306, 0.5
    %v308 = vtanh.pop %v307
    %v309 = vmul.f32 %v308, 0.5
    %v310 = vadd.f32 %v309, 0.5
    %v311 = vtanh.pop %v306
    %v312 = vsel %vm130, %v311, %v310
    %v314 = vrot.slane %v221, 6
    %v316 = vmul.f32 %v312, %v314
    %318 = vrot.lane.b32.xlu0 %v312, 64
    %v319 = vpop.permute.xlu0 %318
    %v321 = vmul.f32 %v312, %v319
    %323 = vrot.lane.b32.xlu0 %v321, 32
    %v324 = vpop.permute.xlu0 %323
    %v326 = vadd.f32 %v316, %v324
    %v327 = vtanh.pop %v326
    %329 = vrot.lane.b32.xlu0 %v327, 64
    %v330 = vpop.permute.xlu0 %329
    %v332 = vmul.f32 %v312, %v330
    %v334 = vrot.slane %v332, 2
    %335 = vrot.lane.b32.xlu0 %v334, 32
    %v336 = vpop.permute.xlu0 %335
    %v337 = vsel %vm44, %v336, 0
    %339 = vmatprep.subr.mxu0 0.0
    %340 = vmatpush1.msra.mxu0 %v33
    %341 = vmatprep.subr.mxu0 0.0
    %342 = vmatpush1.msra.mxu0 %v34
    %343 = vmatprep.subr.mxu0 0.0
    %344 = vmatpush1.msra.mxu0 %v35
    %345 = vmatprep.subr.mxu0 0.0
    %346 = vmatpush1.msra.mxu0 %v36
    %347 = vmatprep.subr.mxu0 0.0
    %348 = vmatpush1.msra.mxu0 0.0
    %349 = vmatprep.subr.mxu0 0.0
    %350 = vmatpush1.msra.mxu0 0.0
    %351 = vmatprep.subr.mxu0 0.0
    %352 = vmatpush1.msra.mxu0 0.0
    %353 = vmatprep.subr.mxu0 0.0
    %354 = vmatpush1.msra.mxu0 0.0
    %355 = vmatprep.subr.mxu0 0.0
    %356 = vmatpush1.msra.mxu0 0.0
    %357 = vmatprep.subr.mxu0 0.0
    %358 = vmatpush1.msra.mxu0 0.0
    %359 = vmatprep.subr.mxu0 0.0
    %360 = vmatpush1.msra.mxu0 0.0
    %361 = vmatprep.subr.mxu0 0.0
    %362 = vmatpush1.msra.mxu0 0.0
    %363 = vmatprep.subr.mxu0 0.0
    %364 = vmatpush1.msra.mxu0 0.0
    %365 = vmatprep.subr.mxu0 0.0
    %366 = vmatpush1.msra.mxu0 0.0
    %367 = vmatprep.subr.mxu0 0.0
    %368 = vmatpush1.msra.mxu0 0.0
    %369 = vmatprep.subr.mxu0 0.0
    %370 = vmatpush1.msra.mxu0 0.0
    %371 = vmatprep.subr.mxu0 0.0
    %372 = vmatpush1.msra.mxu0 0.0
    %373 = vmatprep.subr.mxu0 0.0
    %374 = vmatpush1.msra.mxu0 0.0
    %375 = vmatprep.subr.mxu0 0.0
    %376 = vmatpush1.msra.mxu0 0.0
    %377 = vmatprep.subr.mxu0 0.0
    %378 = vmatpush1.msra.mxu0 0.0
    %379 = vmatprep.subr.mxu0 0.0
    %380 = vmatpush1.msra.mxu0 0.0
    %381 = vmatprep.subr.mxu0 0.0
    %382 = vmatpush1.msra.mxu0 0.0
    %383 = vmatprep.subr.mxu0 0.0
    %384 = vmatpush1.msra.mxu0 0.0
    %385 = vmatprep.subr.mxu0 0.0
    %386 = vmatpush1.msra.mxu0 0.0
    %387 = vmatprep.subr.mxu0 0.0
    %388 = vmatpush1.msra.mxu0 0.0
    %389 = vmatprep.subr.mxu0 0.0
    %390 = vmatpush1.msra.mxu0 0.0
    %391 = vmatprep.subr.mxu0 0.0
    %392 = vmatpush1.msra.mxu0 0.0
    %393 = vmatprep.subr.mxu0 0.0
    %394 = vmatpush1.msra.mxu0 0.0
    %395 = vmatprep.subr.mxu0 0.0
    %396 = vmatpush1.msra.mxu0 0.0
    %397 = vmatprep.subr.mxu0 0.0
    %398 = vmatpush1.msra.mxu0 0.0
    %399 = vmatprep.subr.mxu0 0.0
    %400 = vmatpush1.msra.mxu0 0.0
    %401 = vmatprep.subr.mxu0 0.0
    %402 = vmatpush1.msra.mxu0 0.0
    %403 = vmatprep.mubr.f32.mxu0 0.0
    %404 = vmatmul.mubr.f32.gmra.mrb[0].mxu0 %v337
    %v405 = vpop.f32.mrb[0].mxu0
    %v406 = vadd.f32 0.0, %v405
    %v407 = vpop.f32.mrb[0].mxu0
    %408 = vdwg.mxu0
    %v410 = vrot.slane %v406, 4
    %v412 = vadd.f32 %v118, %v410
    %v413 = vmul.f32 %v412, 0.5
    %v414 = vtanh.pop %v413
    %v415 = vmul.f32 %v414, 0.5
    %v416 = vadd.f32 %v415, 0.5
    %v417 = vtanh.pop %v412
    %v418 = vsel %vm130, %v417, %v416
    %v420 = vrot.slane %v326, 6
    %v422 = vmul.f32 %v418, %v420
    %424 = vrot.lane.b32.xlu0 %v418, 64
    %v425 = vpop.permute.xlu0 %424
    %v427 = vmul.f32 %v418, %v425
    %429 = vrot.lane.b32.xlu0 %v427, 32
    %v430 = vpop.permute.xlu0 %429
    %v432 = vadd.f32 %v422, %v430
    %v433 = vtanh.pop %v432
    %435 = vrot.lane.b32.xlu0 %v433, 64
    %v436 = vpop.permute.xlu0 %435
    %v438 = vmul.f32 %v418, %v436
    %v440 = vrot.slane %v438, 4
    %441 = vrot.lane.b32.xlu0 %v440, 32
    %v442 = vpop.permute.xlu0 %441
    %v443 = vsel %vm44, %v442, 0
    %445 = vmatprep.subr.mxu0 0.0
    %446 = vmatpush1.msra.mxu0 %v33
    %447 = vmatprep.subr.mxu0 0.0
    %448 = vmatpush1.msra.mxu0 %v34
    %449 = vmatprep.subr.mxu0 0.0
    %450 = vmatpush1.msra.mxu0 %v35
    %451 = vmatprep.subr.mxu0 0.0
    %452 = vmatpush1.msra.mxu0 %v36
    %453 = vmatprep.subr.mxu0 0.0
    %454 = vmatpush1.msra.mxu0 0.0
    %455 = vmatprep.subr.mxu0 0.0
    %456 = vmatpush1.msra.mxu0 0.0
    %457 = vmatprep.subr.mxu0 0.0
    %458 = vmatpush1.msra.mxu0 0.0
    %459 = vmatprep.subr.mxu0 0.0
    %460 = vmatpush1.msra.mxu0 0.0
    %461 = vmatprep.subr.mxu0 0.0
    %462 = vmatpush1.msra.mxu0 0.0
    %463 = vmatprep.subr.mxu0 0.0
    %464 = vmatpush1.msra.mxu0 0.0
    %465 = vmatprep.subr.mxu0 0.0
    %466 = vmatpush1.msra.mxu0 0.0
    %467 = vmatprep.subr.mxu0 0.0
    %468 = vmatpush1.msra.mxu0 0.0
    %469 = vmatprep.subr.mxu0 0.0
    %470 = vmatpush1.msra.mxu0 0.0
    %471 = vmatprep.subr.mxu0 0.0
    %472 = vmatpush1.msra.mxu0 0.0
    %473 = vmatprep.subr.mxu0 0.0
    %474 = vmatpush1.msra.mxu0 0.0
    %475 = vmatprep.subr.mxu0 0.0
    %476 = vmatpush1.msra.mxu0 0.0
    %477 = vmatprep.subr.mxu0 0.0
    %478 = vmatpush1.msra.mxu0 0.0
    %479 = vmatprep.subr.mxu0 0.0
    %480 = vmatpush1.msra.mxu0 0.0
    %481 = vmatprep.subr.mxu0 0.0
    %482 = vmatpush1.msra.mxu0 0.0
    %483 = vmatprep.subr.mxu0 0.0
    %484 = vmatpush1.msra.mxu0 0.0
    %485 = vmatprep.subr.mxu0 0.0
    %486 = vmatpush1.msra.mxu0 0.0
    %487 = vmatprep.subr.mxu0 0.0
    %488 = vmatpush1.msra.mxu0 0.0
    %489 = vmatprep.subr.mxu0 0.0
    %490 = vmatpush1.msra.mxu0 0.0
    %491 = vmatprep.subr.mxu0 0.0
    %492 = vmatpush1.msra.mxu0 0.0
    %493 = vmatprep.subr.mxu0 0.0
    %494 = vmatpush1.msra.mxu0 0.0
    %495 = vmatprep.subr.mxu0 0.0
    %496 = vmatpush1.msra.mxu0 0.0
    %497 = vmatprep.subr.mxu0 0.0
    %498 = vmatpush1.msra.mxu0 0.0
    %499 = vmatprep.subr.mxu0 0.0
    %500 = vmatpush1.msra.mxu0 0.0
    %501 = vmatprep.subr.mxu0 0.0
    %502 = vmatpush1.msra.mxu0 0.0
    %503 = vmatprep.subr.mxu0 0.0
    %504 = vmatpush1.msra.mxu0 0.0
    %505 = vmatprep.subr.mxu0 0.0
    %506 = vmatpush1.msra.mxu0 0.0
    %507 = vmatprep.subr.mxu0 0.0
    %508 = vmatpush1.msra.mxu0 0.0
    %509 = vmatprep.mubr.f32.mxu0 0.0
    %510 = vmatmul.mubr.f32.gmra.mrb[0].mxu0 %v443
    %v511 = vpop.f32.mrb[0].mxu0
    %v512 = vadd.f32 0.0, %v511
    %v513 = vpop.f32.mrb[0].mxu0
    %514 = vdwg.mxu0
    %v516 = vrot.slane %v512, 2
    %v518 = vadd.f32 %v118, %v516
    %v519 = vmul.f32 %v518, 0.5
    %v520 = vtanh.pop %v519
    %v521 = vmul.f32 %v520, 0.5
    %v522 = vadd.f32 %v521, 0.5
    %v523 = vtanh.pop %v518
    %v524 = vsel %vm130, %v523, %v522
    %v526 = vrot.slane %v432, 6
    %v528 = vmul.f32 %v524, %v526
    %530 = vrot.lane.b32.xlu0 %v524, 64
    %v531 = vpop.permute.xlu0 %530
    %v533 = vmul.f32 %v524, %v531
    %535 = vrot.lane.b32.xlu0 %v533, 32
    %v536 = vpop.permute.xlu0 %535
    %v538 = vadd.f32 %v528, %v536
    %v539 = vtanh.pop %v538
    %541 = vrot.lane.b32.xlu0 %v539, 64
    %v542 = vpop.permute.xlu0 %541
    %v544 = vmul.f32 %v524, %v542
    %v546 = vrot.slane %v544, 6
    %547 = vrot.lane.b32.xlu0 %v546, 32
    %v548 = vpop.permute.xlu0 %547
    %v549 = vsel %vm44, %v548, 0
    %551 = vmatprep.subr.mxu0 0.0
    %552 = vmatpush1.msra.mxu0 %v33
    %553 = vmatprep.subr.mxu0 0.0
    %554 = vmatpush1.msra.mxu0 %v34
    %555 = vmatprep.subr.mxu0 0.0
    %556 = vmatpush1.msra.mxu0 %v35
    %557 = vmatprep.subr.mxu0 0.0
    %558 = vmatpush1.msra.mxu0 %v36
    %559 = vmatprep.subr.mxu0 0.0
    %560 = vmatpush1.msra.mxu0 0.0
    %561 = vmatprep.subr.mxu0 0.0
    %562 = vmatpush1.msra.mxu0 0.0
    %563 = vmatprep.subr.mxu0 0.0
    %564 = vmatpush1.msra.mxu0 0.0
    %565 = vmatprep.subr.mxu0 0.0
    %566 = vmatpush1.msra.mxu0 0.0
    %567 = vmatprep.subr.mxu0 0.0
    %568 = vmatpush1.msra.mxu0 0.0
    %569 = vmatprep.subr.mxu0 0.0
    %570 = vmatpush1.msra.mxu0 0.0
    %571 = vmatprep.subr.mxu0 0.0
    %572 = vmatpush1.msra.mxu0 0.0
    %573 = vmatprep.subr.mxu0 0.0
    %574 = vmatpush1.msra.mxu0 0.0
    %575 = vmatprep.subr.mxu0 0.0
    %576 = vmatpush1.msra.mxu0 0.0
    %577 = vmatprep.subr.mxu0 0.0
    %578 = vmatpush1.msra.mxu0 0.0
    %579 = vmatprep.subr.mxu0 0.0
    %580 = vmatpush1.msra.mxu0 0.0
    %581 = vmatprep.subr.mxu0 0.0
    %582 = vmatpush1.msra.mxu0 0.0
    %583 = vmatprep.subr.mxu0 0.0
    %584 = vmatpush1.msra.mxu0 0.0
    %585 = vmatprep.subr.mxu0 0.0
    %586 = vmatpush1.msra.mxu0 0.0
    %587 = vmatprep.subr.mxu0 0.0
    %588 = vmatpush1.msra.mxu0 0.0
    %589 = vmatprep.subr.mxu0 0.0
    %590 = vmatpush1.msra.mxu0 0.0
    %591 = vmatprep.subr.mxu0 0.0
    %592 = vmatpush1.msra.mxu0 0.0
    %593 = vmatprep.subr.mxu0 0.0
    %594 = vmatpush1.msra.mxu0 0.0
    %595 = vmatprep.subr.mxu0 0.0
    %596 = vmatpush1.msra.mxu0 0.0
    %597 = vmatprep.subr.mxu0 0.0
    %598 = vmatpush1.msra.mxu0 0.0
    %599 = vmatprep.subr.mxu0 0.0
    %600 = vmatpush1.msra.mxu0 0.0
    %601 = vmatprep.subr.mxu0 0.0
    %602 = vmatpush1.msra.mxu0 0.0
    %603 = vmatprep.subr.mxu0 0.0
    %604 = vmatpush1.msra.mxu0 0.0
    %605 = vmatprep.subr.mxu0 0.0
    %606 = vmatpush1.msra.mxu0 0.0
    %607 = vmatprep.subr.mxu0 0.0
    %608 = vmatpush1.msra.mxu0 0.0
    %609 = vmatprep.subr.mxu0 0.0
    %610 = vmatpush1.msra.mxu0 0.0
    %611 = vmatprep.subr.mxu0 0.0
    %612 = vmatpush1.msra.mxu0 0.0
    %613 = vmatprep.subr.mxu0 0.0
    %614 = vmatpush1.msra.mxu0 0.0
    %615 = vmatprep.mubr.f32.mxu0 0.0
    %616 = vmatmul.mubr.f32.gmra.mrb[0].mxu0 %v549
    %v617 = vpop.f32.mrb[0].mxu0
    %v618 = vadd.f32 0.0, %v617
    %v619 = vpop.f32.mrb[0].mxu0
    %620 = vdwg.mxu0
    %v621 = vadd.f32 %v123, %v618
    %v622 = vmul.f32 %v621, 0.5
    %v623 = vtanh.pop %v622
    %v624 = vmul.f32 %v623, 0.5
    %v625 = vadd.f32 %v624, 0.5
    %v626 = vtanh.pop %v621
    %v627 = vsel %vm130, %v626, %v625
    %v629 = vrot.slane %v538, 6
    %v631 = vmul.f32 %v627, %v629
    %633 = vrot.lane.b32.xlu0 %v627, 64
    %v634 = vpop.permute.xlu0 %633
    %v636 = vmul.f32 %v627, %v634
    %638 = vrot.lane.b32.xlu0 %v636, 32
    %v639 = vpop.permute.xlu0 %638
    %v641 = vadd.f32 %v631, %v639
    %v642 = vtanh.pop %v641
    %644 = vrot.lane.b32.xlu0 %v642, 64
    %v645 = vpop.permute.xlu0 %644
    %v647 = vmul.f32 %v627, %v645
    %649 = vrot.lane.b32.xlu0 %v647, 32
    %v650 = vpop.permute.xlu0 %649
    %v651 = vsel %vm44, %v650, 0
    %653 = vmatprep.subr.mxu0 0.0
    %654 = vmatpush1.msra.mxu0 %v33
    %655 = vmatprep.subr.mxu0 0.0
    %656 = vmatpush1.msra.mxu0 %v34
    %657 = vmatprep.subr.mxu0 0.0
    %658 = vmatpush1.msra.mxu0 %v35
    %659 = vmatprep.subr.mxu0 0.0
    %660 = vmatpush1.msra.mxu0 %v36
    %661 = vmatprep.subr.mxu0 0.0
    %662 = vmatpush1.msra.mxu0 0.0
    %663 = vmatprep.subr.mxu0 0.0
    %664 = vmatpush1.msra.mxu0 0.0
    %665 = vmatprep.subr.mxu0 0.0
    %666 = vmatpush1.msra.mxu0 0.0
    %667 = vmatprep.subr.mxu0 0.0
    %668 = vmatpush1.msra.mxu0 0.0
    %669 = vmatprep.subr.mxu0 0.0
    %670 = vmatpush1.msra.mxu0 0.0
    %671 = vmatprep.subr.mxu0 0.0
    %672 = vmatpush1.msra.mxu0 0.0
    %673 = vmatprep.subr.mxu0 0.0
    %674 = vmatpush1.msra.mxu0 0.0
    %675 = vmatprep.subr.mxu0 0.0
    %676 = vmatpush1.msra.mxu0 0.0
    %677 = vmatprep.subr.mxu0 0.0
    %678 = vmatpush1.msra.mxu0 0.0
    %679 = vmatprep.subr.mxu0 0.0
    %680 = vmatpush1.msra.mxu0 0.0
    %681 = vmatprep.subr.mxu0 0.0
    %682 = vmatpush1.msra.mxu0 0.0
    %683 = vmatprep.subr.mxu0 0.0
    %684 = vmatpush1.msra.mxu0 0.0
    %685 = vmatprep.subr.mxu0 0.0
    %686 = vmatpush1.msra.mxu0 0.0
    %687 = vmatprep.subr.mxu0 0.0
    %688 = vmatpush1.msra.mxu0 0.0
    %689 = vmatprep.subr.mxu0 0.0
    %690 = vmatpush1.msra.mxu0 0.0
    %691 = vmatprep.subr.mxu0 0.0
    %692 = vmatpush1.msra.mxu0 0.0
    %693 = vmatprep.subr.mxu0 0.0
    %694 = vmatpush1.msra.mxu0 0.0
    %695 = vmatprep.subr.mxu0 0.0
    %696 = vmatpush1.msra.mxu0 0.0
    %697 = vmatprep.subr.mxu0 0.0
    %698 = vmatpush1.msra.mxu0 0.0
    %699 = vmatprep.subr.mxu0 0.0
    %700 = vmatpush1.msra.mxu0 0.0
    %701 = vmatprep.subr.mxu0 0.0
    %702 = vmatpush1.msra.mxu0 0.0
    %703 = vmatprep.subr.mxu0 0.0
    %704 = vmatpush1.msra.mxu0 0.0
    %705 = vmatprep.subr.mxu0 0.0
    %706 = vmatpush1.msra.mxu0 0.0
    %707 = vmatprep.subr.mxu0 0.0
    %708 = vmatpush1.msra.mxu0 0.0
    %709 = vmatprep.subr.mxu0 0.0
    %710 = vmatpush1.msra.mxu0 0.0
    %711 = vmatprep.subr.mxu0 0.0
    %712 = vmatpush1.msra.mxu0 0.0
    %713 = vmatprep.subr.mxu0 0.0
    %714 = vmatpush1.msra.mxu0 0.0
    %715 = vmatprep.subr.mxu0 0.0
    %716 = vmatpush1.msra.mxu0 0.0
    %717 = vmatprep.mubr.f32.mxu0 0.0
    %718 = vmatmul.mubr.f32.gmra.mrb[0].mxu0 %v651
    %v719 = vpop.f32.mrb[0].mxu0
    %v720 = vadd.f32 0.0, %v719
    %v721 = vpop.f32.mrb[0].mxu0
    %722 = vdwg.mxu0
    %v724 = vrot.slane %v720, 6
    %v726 = vadd.f32 %v123, %v724
    %v727 = vmul.f32 %v726, 0.5
    %v728 = vtanh.pop %v727
    %v729 = vmul.f32 %v728, 0.5
    %v730 = vadd.f32 %v729, 0.5
    %v731 = vtanh.pop %v726
    %v732 = vsel %vm130, %v731, %v730
    %v734 = vrot.slane %v641, 6
    %v736 = vmul.f32 %v732, %v734
    %738 = vrot.lane.b32.xlu0 %v732, 64
    %v739 = vpop.permute.xlu0 %738
    %v741 = vmul.f32 %v732, %v739
    %743 = vrot.lane.b32.xlu0 %v741, 32
    %v744 = vpop.permute.xlu0 %743
    %v746 = vadd.f32 %v736, %v744
    %v747 = vtanh.pop %v746
    %749 = vrot.lane.b32.xlu0 %v747, 64
    %v750 = vpop.permute.xlu0 %749
    %v752 = vmul.f32 %v732, %v750
    %v754 = vrot.slane %v752, 2
    %755 = vrot.lane.b32.xlu0 %v754, 32
    %v756 = vpop.permute.xlu0 %755
    %v757 = vsel %vm44, %v756, 0
    %759 = vmatprep.subr.mxu0 0.0
    %760 = vmatpush1.msra.mxu0 %v33
    %761 = vmatprep.subr.mxu0 0.0
    %762 = vmatpush1.msra.mxu0 %v34
    %763 = vmatprep.subr.mxu0 0.0
    %764 = vmatpush1.msra.mxu0 %v35
    %765 = vmatprep.subr.mxu0 0.0
    %766 = vmatpush1.msra.mxu0 %v36
    %767 = vmatprep.subr.mxu0 0.0
    %768 = vmatpush1.msra.mxu0 0.0
    %769 = vmatprep.subr.mxu0 0.0
    %770 = vmatpush1.msra.mxu0 0.0
    %771 = vmatprep.subr.mxu0 0.0
    %772 = vmatpush1.msra.mxu0 0.0
    %773 = vmatprep.subr.mxu0 0.0
    %774 = vmatpush1.msra.mxu0 0.0
    %775 = vmatprep.subr.mxu0 0.0
    %776 = vmatpush1.msra.mxu0 0.0
    %777 = vmatprep.subr.mxu0 0.0
    %778 = vmatpush1.msra.mxu0 0.0
    %779 = vmatprep.subr.mxu0 0.0
    %780 = vmatpush1.msra.mxu0 0.0
    %781 = vmatprep.subr.mxu0 0.0
    %782 = vmatpush1.msra.mxu0 0.0
    %783 = vmatprep.subr.mxu0 0.0
    %784 = vmatpush1.msra.mxu0 0.0
    %785 = vmatprep.subr.mxu0 0.0
    %786 = vmatpush1.msra.mxu0 0.0
    %787 = vmatprep.subr.mxu0 0.0
    %788 = vmatpush1.msra.mxu0 0.0
    %789 = vmatprep.subr.mxu0 0.0
    %790 = vmatpush1.msra.mxu0 0.0
    %791 = vmatprep.subr.mxu0 0.0
    %792 = vmatpush1.msra.mxu0 0.0
    %793 = vmatprep.subr.mxu0 0.0
    %794 = vmatpush1.msra.mxu0 0.0
    %795 = vmatprep.subr.mxu0 0.0
    %796 = vmatpush1.msra.mxu0 0.0
    %797 = vmatprep.subr.mxu0 0.0
    %798 = vmatpush1.msra.mxu0 0.0
    %799 = vmatprep.subr.mxu0 0.0
    %800 = vmatpush1.msra.mxu0 0.0
    %801 = vmatprep.subr.mxu0 0.0
    %802 = vmatpush1.msra.mxu0 0.0
    %803 = vmatprep.subr.mxu0 0.0
    %804 = vmatpush1.msra.mxu0 0.0
    %805 = vmatprep.subr.mxu0 0.0
    %806 = vmatpush1.msra.mxu0 0.0
    %807 = vmatprep.subr.mxu0 0.0
    %808 = vmatpush1.msra.mxu0 0.0
    %809 = vmatprep.subr.mxu0 0.0
    %810 = vmatpush1.msra.mxu0 0.0
    %811 = vmatprep.subr.mxu0 0.0
    %812 = vmatpush1.msra.mxu0 0.0
    %813 = vmatprep.subr.mxu0 0.0
    %814 = vmatpush1.msra.mxu0 0.0
    %815 = vmatprep.subr.mxu0 0.0
    %816 = vmatpush1.msra.mxu0 0.0
    %817 = vmatprep.subr.mxu0 0.0
    %818 = vmatpush1.msra.mxu0 0.0
    %819 = vmatprep.subr.mxu0 0.0
    %820 = vmatpush1.msra.mxu0 0.0
    %821 = vmatprep.subr.mxu0 0.0
    %822 = vmatpush1.msra.mxu0 0.0
    %823 = vmatprep.mubr.f32.mxu0 0.0
    %824 = vmatmul.mubr.f32.gmra.mrb[0].mxu0 %v757
    %v825 = vpop.f32.mrb[0].mxu0
    %v826 = vadd.f32 0.0, %v825
    %v827 = vpop.f32.mrb[0].mxu0
    %828 = vdwg.mxu0
    %v830 = vrot.slane %v826, 4
    %v832 = vadd.f32 %v123, %v830
    %v833 = vmul.f32 %v832, 0.5
    %v834 = vtanh.pop %v833
    %v835 = vmul.f32 %v834, 0.5
    %v836 = vadd.f32 %v835, 0.5
    %v837 = vtanh.pop %v832
    %v838 = vsel %vm130, %v837, %v836
    %v840 = vrot.slane %v746, 6
    %v842 = vmul.f32 %v838, %v840
    %844 = vrot.lane.b32.xlu0 %v838, 64
    %v845 = vpop.permute.xlu0 %844
    %v847 = vmul.f32 %v838, %v845
    %849 = vrot.lane.b32.xlu0 %v847, 32
    %v850 = vpop.permute.xlu0 %849
    %v852 = vadd.f32 %v842, %v850
    %v853 = vtanh.pop %v852
    %855 = vrot.lane.b32.xlu0 %v853, 64
    %v856 = vpop.permute.xlu0 %855
    %v858 = vmul.f32 %v838, %v856
    %v860 = vrot.slane %v858, 4
    %861 = vrot.lane.b32.xlu0 %v860, 32
    %v862 = vpop.permute.xlu0 %861
    %v863 = vsel %vm44, %v862, 0
    %865 = vmatprep.subr.mxu0 0.0
    %866 = vmatpush1.msra.mxu0 %v33
    %867 = vmatprep.subr.mxu0 0.0
    %868 = vmatpush1.msra.mxu0 %v34
    %869 = vmatprep.subr.mxu0 0.0
    %870 = vmatpush1.msra.mxu0 %v35
    %871 = vmatprep.subr.mxu0 0.0
    %872 = vmatpush1.msra.mxu0 %v36
    %873 = vmatprep.subr.mxu0 0.0
    %874 = vmatpush1.msra.mxu0 0.0
    %875 = vmatprep.subr.mxu0 0.0
    %876 = vmatpush1.msra.mxu0 0.0
    %877 = vmatprep.subr.mxu0 0.0
    %878 = vmatpush1.msra.mxu0 0.0
    %879 = vmatprep.subr.mxu0 0.0
    %880 = vmatpush1.msra.mxu0 0.0
    %881 = vmatprep.subr.mxu0 0.0
    %882 = vmatpush1.msra.mxu0 0.0
    %883 = vmatprep.subr.mxu0 0.0
    %884 = vmatpush1.msra.mxu0 0.0
    %885 = vmatprep.subr.mxu0 0.0
    %886 = vmatpush1.msra.mxu0 0.0
    %887 = vmatprep.subr.mxu0 0.0
    %888 = vmatpush1.msra.mxu0 0.0
    %889 = vmatprep.subr.mxu0 0.0
    %890 = vmatpush1.msra.mxu0 0.0
    %891 = vmatprep.subr.mxu0 0.0
    %892 = vmatpush1.msra.mxu0 0.0
    %893 = vmatprep.subr.mxu0 0.0
    %894 = vmatpush1.msra.mxu0 0.0
    %895 = vmatprep.subr.mxu0 0.0
    %896 = vmatpush1.msra.mxu0 0.0
    %897 = vmatprep.subr.mxu0 0.0
    %898 = vmatpush1.msra.mxu0 0.0
    %899 = vmatprep.subr.mxu0 0.0
    %900 = vmatpush1.msra.mxu0 0.0
    %901 = vmatprep.subr.mxu0 0.0
    %902 = vmatpush1.msra.mxu0 0.0
    %903 = vmatprep.subr.mxu0 0.0
    %904 = vmatpush1.msra.mxu0 0.0
    %905 = vmatprep.subr.mxu0 0.0
    %906 = vmatpush1.msra.mxu0 0.0
    %907 = vmatprep.subr.mxu0 0.0
    %908 = vmatpush1.msra.mxu0 0.0
    %909 = vmatprep.subr.mxu0 0.0
    %910 = vmatpush1.msra.mxu0 0.0
    %911 = vmatprep.subr.mxu0 0.0
    %912 = vmatpush1.msra.mxu0 0.0
    %913 = vmatprep.subr.mxu0 0.0
    %914 = vmatpush1.msra.mxu0 0.0
    %915 = vmatprep.subr.mxu0 0.0
    %916 = vmatpush1.msra.mxu0 0.0
    %917 = vmatprep.subr.mxu0 0.0
    %918 = vmatpush1.msra.mxu0 0.0
    %919 = vmatprep.subr.mxu0 0.0
    %920 = vmatpush1.msra.mxu0 0.0
    %921 = vmatprep.subr.mxu0 0.0
    %922 = vmatpush1.msra.mxu0 0.0
    %923 = vmatprep.subr.mxu0 0.0
    %924 = vmatpush1.msra.mxu0 0.0
    %925 = vmatprep.subr.mxu0 0.0
    %926 = vmatpush1.msra.mxu0 0.0
    %927 = vmatprep.subr.mxu0 0.0
    %928 = vmatpush1.msra.mxu0 0.0
    %929 = vmatprep.mubr.f32.mxu0 0.0
    %930 = vmatmul.mubr.f32.gmra.mrb[0].mxu0 %v863
    %v931 = vpop.f32.mrb[0].mxu0
    %v932 = vadd.f32 0.0, %v931
    %v933 = vpop.f32.mrb[0].mxu0
    %934 = vdwg.mxu0
    %v936 = vrot.slane %v932, 2
    %v938 = vadd.f32 %v123, %v936
    %v939 = vmul.f32 %v938, 0.5
    %v940 = vtanh.pop %v939
    %v941 = vmul.f32 %v940, 0.5
    %v942 = vadd.f32 %v941, 0.5
    %v943 = vtanh.pop %v938
    %v944 = vsel %vm130, %v943, %v942
    %v946 = vrot.slane %v852, 6
    %v948 = vmul.f32 %v944, %v946
    %950 = vrot.lane.b32.xlu0 %v944, 64
    %v951 = vpop.permute.xlu0 %950
    %v953 = vmul.f32 %v944, %v951
    %955 = vrot.lane.b32.xlu0 %v953, 32
    %v956 = vpop.permute.xlu0 %955
    %v958 = vadd.f32 %v948, %v956
    %v959 = vtanh.pop %v958
    %961 = vrot.lane.b32.xlu0 %v959, 64
    %v962 = vpop.permute.xlu0 %961
    %v964 = vmul.f32 %v944, %v962
    %v965 = vld [vmem:[%s2] sm:$0xff]
    %v966 = vld [vmem:[%s2 + $0x8] sm:$0xff]
    %v967 = vld [vmem:[%s2 + $0x10] sm:$0xff]
    %v968 = vld [vmem:[%s2 + $0x18] sm:$0xff]
    %v969 = vld [vmem:[%s2 + $0x20] sm:$0x1]
    %v970 = vlaneseq
    %v971 = vshrl.u32 %v970, 7
    %v972 = vsub.s32 0, %v971
    %v973 = vrot.slane %v969, %v972
    %v975 = vrot.slane %v964, 6
    %976 = vrot.lane.b32.xlu0 %v975, 32
    %v977 = vpop.permute.xlu0 %976
    %v978 = vsel %vm44, %v977, 0
    %980 = vmatprep.subr.mxu0 0.0
    %981 = vmatpush1.msra.mxu0 %v965
    %982 = vmatprep.subr.mxu0 0.0
    %983 = vmatpush1.msra.mxu0 %v966
    %984 = vmatprep.subr.mxu0 0.0
    %985 = vmatpush1.msra.mxu0 %v967
    %986 = vmatprep.subr.mxu0 0.0
    %987 = vmatpush1.msra.mxu0 %v968
    %988 = vmatprep.subr.mxu0 0.0
    %989 = vmatpush1.msra.mxu0 0.0
    %990 = vmatprep.subr.mxu0 0.0
    %991 = vmatpush1.msra.mxu0 0.0
    %992 = vmatprep.subr.mxu0 0.0
    %993 = vmatpush1.msra.mxu0 0.0
    %994 = vmatprep.subr.mxu0 0.0
    %995 = vmatpush1.msra.mxu0 0.0
    %996 = vmatprep.subr.mxu0 0.0
    %997 = vmatpush1.msra.mxu0 0.0
    %998 = vmatprep.subr.mxu0 0.0
    %999 = vmatpush1.msra.mxu0 0.0
    %1000 = vmatprep.subr.mxu0 0.0
    %1001 = vmatpush1.msra.mxu0 0.0
    %1002 = vmatprep.subr.mxu0 0.0
    %1003 = vmatpush1.msra.mxu0 0.0
    %1004 = vmatprep.subr.mxu0 0.0
    %1005 = vmatpush1.msra.mxu0 0.0
    %1006 = vmatprep.subr.mxu0 0.0
    %1007 = vmatpush1.msra.mxu0 0.0
    %1008 = vmatprep.subr.mxu0 0.0
    %1009 = vmatpush1.msra.mxu0 0.0
    %1010 = vmatprep.subr.mxu0 0.0
    %1011 = vmatpush1.msra.mxu0 0.0
    %1012 = vmatprep.subr.mxu0 0.0
    %1013 = vmatpush1.msra.mxu0 0.0
    %1014 = vmatprep.subr.mxu0 0.0
    %1015 = vmatpush1.msra.mxu0 0.0
    %1016 = vmatprep.subr.mxu0 0.0
    %1017 = vmatpush1.msra.mxu0 0.0
    %1018 = vmatprep.subr.mxu0 0.0
    %1019 = vmatpush1.msra.mxu0 0.0
    %1020 = vmatprep.subr.mxu0 0.0
    %1021 = vmatpush1.msra.mxu0 0.0
    %1022 = vmatprep.subr.mxu0 0.0
    %1023 = vmatpush1.msra.mxu0 0.0
    %1024 = vmatprep.subr.mxu0 0.0
    %1025 = vmatpush1.msra.mxu0 0.0
    %1026 = vmatprep.subr.mxu0 0.0
    %1027 = vmatpush1.msra.mxu0 0.0
    %1028 = vmatprep.subr.mxu0 0.0
    %1029 = vmatpush1.msra.mxu0 0.0
    %1030 = vmatprep.subr.mxu0 0.0
    %1031 = vmatpush1.msra.mxu0 0.0
    %1032 = vmatprep.subr.mxu0 0.0
    %1033 = vmatpush1.msra.mxu0 0.0
    %1034 = vmatprep.subr.mxu0 0.0
    %1035 = vmatpush1.msra.mxu0 0.0
    %1036 = vmatprep.subr.mxu0 0.0
    %1037 = vmatpush1.msra.mxu0 0.0
    %1038 = vmatprep.subr.mxu0 0.0
    %1039 = vmatpush1.msra.mxu0 0.0
    %1040 = vmatprep.subr.mxu0 0.0
    %1041 = vmatpush1.msra.mxu0 0.0
    %1042 = vmatprep.subr.mxu0 0.0
    %1043 = vmatpush1.msra.mxu0 0.0
    %1044 = vmatprep.mubr.f32.mxu0 0.0
    %1045 = vmatmul.mubr.f32.gmra.mrb[0].mxu0 %v978
    %v1046 = vpop.f32.mrb[0].mxu0
    %v1047 = vadd.f32 %v973, %v1046
    %v1048 = vpop.f32.mrb[0].mxu0
    %1049 = vdwg.mxu0
    %vm1050 = vcmask 25600
    %v1051 = vsel %vm1050, %v1047, -inf
    %1052 = vmax.xlane.f32.xlu0 %v1051
    %v1053 = vpop.xlane.xlu0 %1052
    %v1054 = vsub.f32 %v1047, %v1053
    %v1055 = vmul.f32 %v1054, 1.442695
    %v1056 = vpow.pop %v1055
    %v1057 = vsel %vm1050, %v1056, 0.0
    %1058 = vadd.xlane.f32.xlu0 %v1057
    %v1059 = vpop.xlane.xlu0 %1058
    %v1060 = vrcp.pop %v1059
    %v1061 = vmul.f32 %v1056, %v1060
    %1062 = vst.msk [vmem:[#allocation5] sm:$0x3] %vm1050, %v1061
    // Predicated region
    $region18: #{tpu_custom_call.1} parent=1 // pred_check
      _
    $region19: #{tpu_custom_call.1} parent=1 // pred_check_branch
      %1064 = sbr.rel (0) target = $region21
    $region20: #{tpu_custom_call.1} parent=1 // pred_region
      %s1066 = ssub.s32 32, 32
      %1067 = vsyncadd [#allocation4], %s1066
      %s1069 = sshll.u32 [#allocation5], 4
      %s1070 = int_to_ptr.vmem [resolvable:$true] %s1069
      %1072 = dma.vmem_to_hbm [thread:$0]  %s1070, 32, %s3, [#allocation4]
    $region21: #{tpu_custom_call.1} parent=1 // pred_fallthru
      _
    // Predicated region
    $region22: #{tpu_custom_call.1} parent=1 // pred_check
      _
    $region23: #{tpu_custom_call.1} parent=1 // pred_check_branch
      %1074 = sbr.rel (0) target = $region25
    $region24: #{tpu_custom_call.1} parent=1 // pred_region
      %1075 = dma.done [#allocation4], 32
    $region25: #{tpu_custom_call.1} parent=1 // pred_fallthru
      _
    %1076 = vsyncpa [#allocation3], 1
    %1077 = vsyncpa [#allocation4], 1

</llo_original>
